<compile_context>
chip_gen: v6e
topology: v6e:2x2x1
jax: 0.10.0
libtpu: 0.0.40
codegen_flags: <defaults>
</compile_context>

<pallas_src>
import functools

import numpy as np
import jax
import jax.numpy as jnp
from jax import lax
from jax.experimental import pallas as pl
from jax.experimental.pallas import tpu as pltpu


def _make_kernel(T, I, H, L):
    LH = L * H          # packed state width (all layers' h / c)
    GW = 4 * LH         # packed gate width, gate-type major: [i | f | g | o]

    def kernel(x_ref, slab_ref, out_ref):
        # x_ref    : (1, T, I)     raw batch_first input (batch = 1)
        # slab_ref : (LH+I+3, GW)  pre-packed weights:
        #   rows [0, LH)         Wcomb : recurrent + next-layer input proj
        #   row  LH              b     : b_ih + b_hh per gate band
        #   rows [LH+1, LH+1+I)  Wih0  : layer-0 input proj (layer-0 cols only)
        #   row  LH+1+I          wfc   : FC weight in lanes [(L-1)*H, L*H)
        #   row  LH+2+I          bfc   : FC bias in lane 0
        wcomb = slab_ref[0:LH, :]                          # (LH, GW)
        b = slab_ref[LH:LH + 1, :]                         # (1, GW)
        wih0 = slab_ref[LH + 1:LH + 1 + I, :]              # (I, GW)
        wfc = slab_ref[LH + 1 + I:LH + 2 + I, 0:LH]        # (1, LH)
        bfc = slab_ref[LH + 2 + I:LH + 3 + I, 0:1]         # (1, 1)

        x = x_ref[0]                                       # (T, I)
        # Layer-0 input projection (+ biases) for the whole sequence, one shot,
        # completely off the recurrent critical path.
        if I == 1:
            gx_all = x * wih0 + b                          # (T, GW) broadcast
        else:
            gx_all = jnp.dot(x, wih0,
                             preferred_element_type=jnp.float32) + b

        h = jnp.zeros((1, LH), jnp.float32)
        c = jnp.zeros((1, LH), jnp.float32)
        lane = lax.broadcasted_iota(jnp.int32, (1, LH), 1)

        # Wavefront: at step s layer l processes timestep t = s - l.  h holds
        # every layer's hidden state; Wcomb routes band l both to layer l's
        # recurrent gates and to layer (l+1)'s input projection, so one matmul
        # plus packed activations advances the whole wavefront.
        for s in range(T + L - 1):                         # static unroll
            gx_s = gx_all[s:s + 1, :] if s < T else b
            gates = gx_s + jnp.dot(h, wcomb,
                                   preferred_element_type=jnp.float32)
            sg = jax.nn.sigmoid(gates)                     # one packed sigmoid
            i_g = sg[:, 0 * LH:1 * LH]
            f_g = sg[:, 1 * LH:2 * LH]
            g_g = 2.0 * sg[:, 2 * LH:3 * LH] - 1.0         # tanh via 2x-scaled cols
            o_g = sg[:, 3 * LH:4 * LH]
            c_new = f_g * c + i_g * g_g
            h_new = o_g * jnp.tanh(c_new)                  # one packed tanh
            if s < L - 1:
                # Layers that have not started yet must keep zero state.
                active = lane < (s + 1) * H
                c = jnp.where(active, c_new, 0.0)
                h = jnp.where(active, h_new, 0.0)
            else:
                c = c_new
                h = h_new

        # Final FC on the last layer's final h (wfc is zero outside that band).
        out_ref[...] = jnp.sum(h * wfc, axis=1, keepdims=True) + bfc

    return kernel


@functools.lru_cache(maxsize=None)
def build_lstm_forward(T, I, H, L):
    """Build (once) the jitted pallas forward for static dims (T, I, H, L)."""
    kernel = _make_kernel(T, I, H, L)
    call = pl.pallas_call(
        kernel,
        out_shape=jax.ShapeDtypeStruct((1, 1), jnp.float32),
        in_specs=[pl.BlockSpec(memory_space=pltpu.MemorySpace.VMEM)] * 2,
        out_specs=pl.BlockSpec(memory_space=pltpu.MemorySpace.VMEM),
    )

    @jax.jit
    def forward(x, slab):
        return call(x, slab).reshape(1)

    return forward


def pack_params(params, input_size, hiddens, layers):
    """One-time packing of PyTorch-layout LSTM+FC params into a single slab."""
    H, L, I = hiddens, layers, input_size
    LH = L * H
    GW = 4 * LH

    wcomb = np.zeros((LH, GW), np.float32)
    b = np.zeros((1, GW), np.float32)
    wih0 = np.zeros((I, GW), np.float32)
    for l in range(L):
        whh = np.asarray(params["w_hh"][l], np.float32)            # (4H, H)
        bias = (np.asarray(params["b_ih"][l], np.float32)
                + np.asarray(params["b_hh"][l], np.float32))        # (4H,)
        for g in range(4):
            # recurrent: h_l -> layer-l gates
            wcomb[l * H:(l + 1) * H,
                  g * LH + l * H: g * LH + (l + 1) * H] = whh[g * H:(g + 1) * H, :].T
            b[0, g * LH + l * H: g * LH + (l + 1) * H] = bias[g * H:(g + 1) * H]
        if l + 1 < L:
            wih_n = np.asarray(params["w_ih"][l + 1], np.float32)   # (4H, H)
            for g in range(4):
                # feed-forward: h_l -> layer-(l+1) input projection
                wcomb[l * H:(l + 1) * H,
                      g * LH + (l + 1) * H: g * LH + (l + 2) * H] = \
                    wih_n[g * H:(g + 1) * H, :].T
    wih_0 = np.asarray(params["w_ih"][0], np.float32)               # (4H, I)
    for g in range(4):
        wih0[:, g * LH: g * LH + H] = wih_0[g * H:(g + 1) * H, :].T

    # Fold tanh(g) into the packed sigmoid: pre-scale g-gate columns/bias by 2
    # so the kernel recovers tanh(z) = 2*sigmoid(2z) - 1.
    gband = slice(2 * LH, 3 * LH)
    wcomb[:, gband] *= 2.0
    b[:, gband] *= 2.0
    wih0[:, gband] *= 2.0

    wfc_row = np.zeros((1, GW), np.float32)
    wfc_row[0, (L - 1) * H: L * H] = np.asarray(params["w_fc"], np.float32)[0]
    bfc_row = np.zeros((1, GW), np.float32)
    bfc_row[0, 0] = np.asarray(params["b_fc"], np.float32)[0]

    slab = np.concatenate([wcomb, b, wih0, wfc_row, bfc_row], axis=0)
    return jnp.asarray(slab)                                        # (LH+I+3, GW)


def ref_forward(x, params, hiddens, layers):
    """Pure-JAX reference mirroring torch.nn.LSTM (batch_first) + Linear."""
    B, T, I = x.shape
    H, L = hiddens, layers
    seq = x[0]  # (T, I)
    for l in range(L):
        W_ih, W_hh = params["w_ih"][l], params["w_hh"][l]
        b = params["b_ih"][l] + params["b_hh"][l]
        h = jnp.zeros((H,), jnp.float32)
        c = jnp.zeros((H,), jnp.float32)
        outs = []
        for t in range(T):
            gates = seq[t] @ W_ih.T + h @ W_hh.T + b
            i_g = jax.nn.sigmoid(gates[0:H])
            f_g = jax.nn.sigmoid(gates[H:2 * H])
            g_g = jnp.tanh(gates[2 * H:3 * H])
            o_g = jax.nn.sigmoid(gates[3 * H:4 * H])
            c = f_g * c + i_g * g_g
            h = o_g * jnp.tanh(c)
            outs.append(h)
        seq = jnp.stack(outs)  # (T, H)
    y = seq[-1] @ params["w_fc"].T + params["b_fc"]
    return y.reshape(1)


def init_params(key, input_size, hiddens, layers):
    """Deterministic init, PyTorch-like U(-1/sqrt(H), 1/sqrt(H))."""
    H = hiddens
    k = 1.0 / np.sqrt(H)
    params = {"w_ih": [], "w_hh": [], "b_ih": [], "b_hh": []}
    for l in range(layers):
        in_l = input_size if l == 0 else H
        key, k0, k1, k2, k3 = jax.random.split(key, 5)
        params["w_ih"].append(jax.random.uniform(k0, (4 * H, in_l), jnp.float32, -k, k))
        params["w_hh"].append(jax.random.uniform(k1, (4 * H, H), jnp.float32, -k, k))
        params["b_ih"].append(jax.random.uniform(k2, (4 * H,), jnp.float32, -k, k))
        params["b_hh"].append(jax.random.uniform(k3, (4 * H,), jnp.float32, -k, k))
    key, k1, k2 = jax.random.split(key, 3)
    params["w_fc"] = jax.random.uniform(k1, (1, H), jnp.float32, -k, k)
    params["b_fc"] = jax.random.uniform(k2, (1,), jnp.float32, -k, k)
    return params


if __name__ == "__main__":
    input_size, hiddens, layers = 1, 6, 3
    seq_len = 8

    key = jax.random.PRNGKey(0)
    pkey, xkey = jax.random.split(key)
    params = init_params(pkey, input_size, hiddens, layers)
    x = jax.random.normal(xkey, (1, seq_len, input_size), jnp.float32)

    # One-time init-side work (hoisted out of the per-call path).
    slab = pack_params(params, input_size, hiddens, layers)
    forward = build_lstm_forward(seq_len, input_size, hiddens, layers)

    y = forward(x, slab)
    jax.block_until_ready(y)

    y_ref = ref_forward(x, params, hiddens, layers)
    np.testing.assert_allclose(np.asarray(y), np.asarray(y_ref),
                               rtol=1e-5, atol=1e-5)
    print("KERNEL_OK")
</pallas_src>

<mosaic_0001>
module attributes {stable_mosaic.version = 11 : i64} {
  func.func @kernel(%arg0: memref<1x8x1xf32, #tpu.memory_space<vmem>>, %arg1: memref<22x72xf32, #tpu.memory_space<vmem>>, %arg2: memref<1x1xf32, #tpu.memory_space<vmem>>) attributes {dimension_semantics = [], scalar_prefetch = 0 : i64, scratch_operands = 0 : i64, tpu.core_type = #tpu.core_type<tc>} {
    %c0 = arith.constant 0 : index
    %c0_0 = arith.constant 0 : index
    %0 = vector.load %arg1[%c0, %c0_0] : memref<22x72xf32, #tpu.memory_space<vmem>>, vector<18x72xf32>
    %c18 = arith.constant 18 : index
    %c0_1 = arith.constant 0 : index
    %1 = vector.load %arg1[%c18, %c0_1] : memref<22x72xf32, #tpu.memory_space<vmem>>, vector<1x72xf32>
    %c19 = arith.constant 19 : index
    %c0_2 = arith.constant 0 : index
    %2 = vector.load %arg1[%c19, %c0_2] : memref<22x72xf32, #tpu.memory_space<vmem>>, vector<1x72xf32>
    %c20 = arith.constant 20 : index
    %c0_3 = arith.constant 0 : index
    %3 = vector.load %arg1[%c20, %c0_3] : memref<22x72xf32, #tpu.memory_space<vmem>>, vector<1x18xf32>
    %c21 = arith.constant 21 : index
    %c0_4 = arith.constant 0 : index
    %4 = vector.load %arg1[%c21, %c0_4] : memref<22x72xf32, #tpu.memory_space<vmem>>, vector<1x1xf32>
    %c0_5 = arith.constant 0 : index
    %c0_6 = arith.constant 0 : index
    %c0_7 = arith.constant 0 : index
    %5 = vector.load %arg0[%c0_5, %c0_6, %c0_7] : memref<1x8x1xf32, #tpu.memory_space<vmem>>, vector<1x8x1xf32>
    %6 = vector.shape_cast %5 : vector<1x8x1xf32> to vector<8x1xf32>
    %7 = vector.broadcast %6 : vector<8x1xf32> to vector<8x72xf32>
    %8 = vector.broadcast %2 : vector<1x72xf32> to vector<8x72xf32>
    %9 = arith.mulf %7, %8 : vector<8x72xf32>
    %10 = vector.broadcast %1 : vector<1x72xf32> to vector<8x72xf32>
    %11 = arith.addf %9, %10 : vector<8x72xf32>
    %cst = arith.constant 0.000000e+00 : f32
    %12 = vector.broadcast %cst : f32 to vector<1x18xf32>
    %cst_8 = arith.constant 0.000000e+00 : f32
    %13 = vector.broadcast %cst_8 : f32 to vector<1x18xf32>
    %14 = tpu.iota {dimensions = array<i32: 1>} : vector<1x18xi32>
    %15 = vector.extract_strided_slice %11 {offsets = [0, 0], sizes = [1, 72], strides = [1, 1]} : vector<8x72xf32> to vector<1x72xf32>
    %cst_9 = arith.constant dense<0.000000e+00> : vector<1x72xf32>
    %16 = tpu.matmul %12, %0, %cst_9 {dimension_numbers = #tpu.dot_dimension_numbers<[1], [0], [0], [1], [0, 0, 1, 1], [], []>} : vector<1x18xf32>, vector<18x72xf32>, vector<1x72xf32> -> vector<1x72xf32>
    %17 = arith.addf %15, %16 : vector<1x72xf32>
    %18 = arith.negf %17 : vector<1x72xf32>
    %19 = math.exp %18 : vector<1x72xf32>
    %cst_10 = arith.constant 1.000000e+00 : f32
    %20 = vector.broadcast %cst_10 : f32 to vector<1x72xf32>
    %21 = arith.addf %20, %19 : vector<1x72xf32>
    %22 = arith.divf %20, %21 : vector<1x72xf32>
    %23 = vector.extract_strided_slice %22 {offsets = [0, 0], sizes = [1, 18], strides = [1, 1]} : vector<1x72xf32> to vector<1x18xf32>
    %24 = vector.extract_strided_slice %22 {offsets = [0, 18], sizes = [1, 18], strides = [1, 1]} : vector<1x72xf32> to vector<1x18xf32>
    %25 = vector.extract_strided_slice %22 {offsets = [0, 36], sizes = [1, 18], strides = [1, 1]} : vector<1x72xf32> to vector<1x18xf32>
    %cst_11 = arith.constant 2.000000e+00 : f32
    %26 = vector.broadcast %cst_11 : f32 to vector<1x18xf32>
    %27 = arith.mulf %26, %25 : vector<1x18xf32>
    %cst_12 = arith.constant 1.000000e+00 : f32
    %28 = vector.broadcast %cst_12 : f32 to vector<1x18xf32>
    %29 = arith.subf %27, %28 : vector<1x18xf32>
    %30 = vector.extract_strided_slice %22 {offsets = [0, 54], sizes = [1, 18], strides = [1, 1]} : vector<1x72xf32> to vector<1x18xf32>
    %31 = arith.mulf %24, %13 : vector<1x18xf32>
    %32 = arith.mulf %23, %29 : vector<1x18xf32>
    %33 = arith.addf %31, %32 : vector<1x18xf32>
    %34 = math.tanh %33 : vector<1x18xf32>
    %35 = arith.mulf %30, %34 : vector<1x18xf32>
    %c6_i32 = arith.constant 6 : i32
    %36 = vector.broadcast %c6_i32 : i32 to vector<1x18xi32>
    %37 = arith.cmpi slt, %14, %36 : vector<1x18xi32>
    %cst_13 = arith.constant 0.000000e+00 : f32
    %38 = vector.broadcast %cst_13 : f32 to vector<1x18xf32>
    %39 = arith.select %37, %33, %38 : vector<1x18xi1>, vector<1x18xf32>
    %cst_14 = arith.constant 0.000000e+00 : f32
    %40 = vector.broadcast %cst_14 : f32 to vector<1x18xf32>
    %41 = arith.select %37, %35, %40 : vector<1x18xi1>, vector<1x18xf32>
    %42 = vector.extract_strided_slice %11 {offsets = [1, 0], sizes = [1, 72], strides = [1, 1]} : vector<8x72xf32> to vector<1x72xf32>
    %cst_15 = arith.constant dense<0.000000e+00> : vector<1x72xf32>
    %43 = tpu.matmul %41, %0, %cst_15 {dimension_numbers = #tpu.dot_dimension_numbers<[1], [0], [0], [1], [0, 0, 1, 1], [], []>} : vector<1x18xf32>, vector<18x72xf32>, vector<1x72xf32> -> vector<1x72xf32>
    %44 = arith.addf %42, %43 : vector<1x72xf32>
    %45 = arith.negf %44 : vector<1x72xf32>
    %46 = math.exp %45 : vector<1x72xf32>
    %cst_16 = arith.constant 1.000000e+00 : f32
    %47 = vector.broadcast %cst_16 : f32 to vector<1x72xf32>
    %48 = arith.addf %47, %46 : vector<1x72xf32>
    %49 = arith.divf %47, %48 : vector<1x72xf32>
    %50 = vector.extract_strided_slice %49 {offsets = [0, 0], sizes = [1, 18], strides = [1, 1]} : vector<1x72xf32> to vector<1x18xf32>
    %51 = vector.extract_strided_slice %49 {offsets = [0, 18], sizes = [1, 18], strides = [1, 1]} : vector<1x72xf32> to vector<1x18xf32>
    %52 = vector.extract_strided_slice %49 {offsets = [0, 36], sizes = [1, 18], strides = [1, 1]} : vector<1x72xf32> to vector<1x18xf32>
    %cst_17 = arith.constant 2.000000e+00 : f32
    %53 = vector.broadcast %cst_17 : f32 to vector<1x18xf32>
    %54 = arith.mulf %53, %52 : vector<1x18xf32>
    %cst_18 = arith.constant 1.000000e+00 : f32
    %55 = vector.broadcast %cst_18 : f32 to vector<1x18xf32>
    %56 = arith.subf %54, %55 : vector<1x18xf32>
    %57 = vector.extract_strided_slice %49 {offsets = [0, 54], sizes = [1, 18], strides = [1, 1]} : vector<1x72xf32> to vector<1x18xf32>
    %58 = arith.mulf %51, %39 : vector<1x18xf32>
    %59 = arith.mulf %50, %56 : vector<1x18xf32>
    %60 = arith.addf %58, %59 : vector<1x18xf32>
    %61 = math.tanh %60 : vector<1x18xf32>
    %62 = arith.mulf %57, %61 : vector<1x18xf32>
    %c12_i32 = arith.constant 12 : i32
    %63 = vector.broadcast %c12_i32 : i32 to vector<1x18xi32>
    %64 = arith.cmpi slt, %14, %63 : vector<1x18xi32>
    %cst_19 = arith.constant 0.000000e+00 : f32
    %65 = vector.broadcast %cst_19 : f32 to vector<1x18xf32>
    %66 = arith.select %64, %60, %65 : vector<1x18xi1>, vector<1x18xf32>
    %cst_20 = arith.constant 0.000000e+00 : f32
    %67 = vector.broadcast %cst_20 : f32 to vector<1x18xf32>
    %68 = arith.select %64, %62, %67 : vector<1x18xi1>, vector<1x18xf32>
    %69 = vector.extract_strided_slice %11 {offsets = [2, 0], sizes = [1, 72], strides = [1, 1]} : vector<8x72xf32> to vector<1x72xf32>
    %cst_21 = arith.constant dense<0.000000e+00> : vector<1x72xf32>
    %70 = tpu.matmul %68, %0, %cst_21 {dimension_numbers = #tpu.dot_dimension_numbers<[1], [0], [0], [1], [0, 0, 1, 1], [], []>} : vector<1x18xf32>, vector<18x72xf32>, vector<1x72xf32> -> vector<1x72xf32>
    %71 = arith.addf %69, %70 : vector<1x72xf32>
    %72 = arith.negf %71 : vector<1x72xf32>
    %73 = math.exp %72 : vector<1x72xf32>
    %cst_22 = arith.constant 1.000000e+00 : f32
    %74 = vector.broadcast %cst_22 : f32 to vector<1x72xf32>
    %75 = arith.addf %74, %73 : vector<1x72xf32>
    %76 = arith.divf %74, %75 : vector<1x72xf32>
    %77 = vector.extract_strided_slice %76 {offsets = [0, 0], sizes = [1, 18], strides = [1, 1]} : vector<1x72xf32> to vector<1x18xf32>
    %78 = vector.extract_strided_slice %76 {offsets = [0, 18], sizes = [1, 18], strides = [1, 1]} : vector<1x72xf32> to vector<1x18xf32>
    %79 = vector.extract_strided_slice %76 {offsets = [0, 36], sizes = [1, 18], strides = [1, 1]} : vector<1x72xf32> to vector<1x18xf32>
    %cst_23 = arith.constant 2.000000e+00 : f32
    %80 = vector.broadcast %cst_23 : f32 to vector<1x18xf32>
    %81 = arith.mulf %80, %79 : vector<1x18xf32>
    %cst_24 = arith.constant 1.000000e+00 : f32
    %82 = vector.broadcast %cst_24 : f32 to vector<1x18xf32>
    %83 = arith.subf %81, %82 : vector<1x18xf32>
    %84 = vector.extract_strided_slice %76 {offsets = [0, 54], sizes = [1, 18], strides = [1, 1]} : vector<1x72xf32> to vector<1x18xf32>
    %85 = arith.mulf %78, %66 : vector<1x18xf32>
    %86 = arith.mulf %77, %83 : vector<1x18xf32>
    %87 = arith.addf %85, %86 : vector<1x18xf32>
    %88 = math.tanh %87 : vector<1x18xf32>
    %89 = arith.mulf %84, %88 : vector<1x18xf32>
    %90 = vector.extract_strided_slice %11 {offsets = [3, 0], sizes = [1, 72], strides = [1, 1]} : vector<8x72xf32> to vector<1x72xf32>
    %cst_25 = arith.constant dense<0.000000e+00> : vector<1x72xf32>
    %91 = tpu.matmul %89, %0, %cst_25 {dimension_numbers = #tpu.dot_dimension_numbers<[1], [0], [0], [1], [0, 0, 1, 1], [], []>} : vector<1x18xf32>, vector<18x72xf32>, vector<1x72xf32> -> vector<1x72xf32>
    %92 = arith.addf %90, %91 : vector<1x72xf32>
    %93 = arith.negf %92 : vector<1x72xf32>
    %94 = math.exp %93 : vector<1x72xf32>
    %cst_26 = arith.constant 1.000000e+00 : f32
    %95 = vector.broadcast %cst_26 : f32 to vector<1x72xf32>
    %96 = arith.addf %95, %94 : vector<1x72xf32>
    %97 = arith.divf %95, %96 : vector<1x72xf32>
    %98 = vector.extract_strided_slice %97 {offsets = [0, 0], sizes = [1, 18], strides = [1, 1]} : vector<1x72xf32> to vector<1x18xf32>
    %99 = vector.extract_strided_slice %97 {offsets = [0, 18], sizes = [1, 18], strides = [1, 1]} : vector<1x72xf32> to vector<1x18xf32>
    %100 = vector.extract_strided_slice %97 {offsets = [0, 36], sizes = [1, 18], strides = [1, 1]} : vector<1x72xf32> to vector<1x18xf32>
    %cst_27 = arith.constant 2.000000e+00 : f32
    %101 = vector.broadcast %cst_27 : f32 to vector<1x18xf32>
    %102 = arith.mulf %101, %100 : vector<1x18xf32>
    %cst_28 = arith.constant 1.000000e+00 : f32
    %103 = vector.broadcast %cst_28 : f32 to vector<1x18xf32>
    %104 = arith.subf %102, %103 : vector<1x18xf32>
    %105 = vector.extract_strided_slice %97 {offsets = [0, 54], sizes = [1, 18], strides = [1, 1]} : vector<1x72xf32> to vector<1x18xf32>
    %106 = arith.mulf %99, %87 : vector<1x18xf32>
    %107 = arith.mulf %98, %104 : vector<1x18xf32>
    %108 = arith.addf %106, %107 : vector<1x18xf32>
    %109 = math.tanh %108 : vector<1x18xf32>
    %110 = arith.mulf %105, %109 : vector<1x18xf32>
    %111 = vector.extract_strided_slice %11 {offsets = [4, 0], sizes = [1, 72], strides = [1, 1]} : vector<8x72xf32> to vector<1x72xf32>
    %cst_29 = arith.constant dense<0.000000e+00> : vector<1x72xf32>
    %112 = tpu.matmul %110, %0, %cst_29 {dimension_numbers = #tpu.dot_dimension_numbers<[1], [0], [0], [1], [0, 0, 1, 1], [], []>} : vector<1x18xf32>, vector<18x72xf32>, vector<1x72xf32> -> vector<1x72xf32>
    %113 = arith.addf %111, %112 : vector<1x72xf32>
    %114 = arith.negf %113 : vector<1x72xf32>
    %115 = math.exp %114 : vector<1x72xf32>
    %cst_30 = arith.constant 1.000000e+00 : f32
    %116 = vector.broadcast %cst_30 : f32 to vector<1x72xf32>
    %117 = arith.addf %116, %115 : vector<1x72xf32>
    %118 = arith.divf %116, %117 : vector<1x72xf32>
    %119 = vector.extract_strided_slice %118 {offsets = [0, 0], sizes = [1, 18], strides = [1, 1]} : vector<1x72xf32> to vector<1x18xf32>
    %120 = vector.extract_strided_slice %118 {offsets = [0, 18], sizes = [1, 18], strides = [1, 1]} : vector<1x72xf32> to vector<1x18xf32>
    %121 = vector.extract_strided_slice %118 {offsets = [0, 36], sizes = [1, 18], strides = [1, 1]} : vector<1x72xf32> to vector<1x18xf32>
    %cst_31 = arith.constant 2.000000e+00 : f32
    %122 = vector.broadcast %cst_31 : f32 to vector<1x18xf32>
    %123 = arith.mulf %122, %121 : vector<1x18xf32>
    %cst_32 = arith.constant 1.000000e+00 : f32
    %124 = vector.broadcast %cst_32 : f32 to vector<1x18xf32>
    %125 = arith.subf %123, %124 : vector<1x18xf32>
    %126 = vector.extract_strided_slice %118 {offsets = [0, 54], sizes = [1, 18], strides = [1, 1]} : vector<1x72xf32> to vector<1x18xf32>
    %127 = arith.mulf %120, %108 : vector<1x18xf32>
    %128 = arith.mulf %119, %125 : vector<1x18xf32>
    %129 = arith.addf %127, %128 : vector<1x18xf32>
    %130 = math.tanh %129 : vector<1x18xf32>
    %131 = arith.mulf %126, %130 : vector<1x18xf32>
    %132 = vector.extract_strided_slice %11 {offsets = [5, 0], sizes = [1, 72], strides = [1, 1]} : vector<8x72xf32> to vector<1x72xf32>
    %cst_33 = arith.constant dense<0.000000e+00> : vector<1x72xf32>
    %133 = tpu.matmul %131, %0, %cst_33 {dimension_numbers = #tpu.dot_dimension_numbers<[1], [0], [0], [1], [0, 0, 1, 1], [], []>} : vector<1x18xf32>, vector<18x72xf32>, vector<1x72xf32> -> vector<1x72xf32>
    %134 = arith.addf %132, %133 : vector<1x72xf32>
    %135 = arith.negf %134 : vector<1x72xf32>
    %136 = math.exp %135 : vector<1x72xf32>
    %cst_34 = arith.constant 1.000000e+00 : f32
    %137 = vector.broadcast %cst_34 : f32 to vector<1x72xf32>
    %138 = arith.addf %137, %136 : vector<1x72xf32>
    %139 = arith.divf %137, %138 : vector<1x72xf32>
    %140 = vector.extract_strided_slice %139 {offsets = [0, 0], sizes = [1, 18], strides = [1, 1]} : vector<1x72xf32> to vector<1x18xf32>
    %141 = vector.extract_strided_slice %139 {offsets = [0, 18], sizes = [1, 18], strides = [1, 1]} : vector<1x72xf32> to vector<1x18xf32>
    %142 = vector.extract_strided_slice %139 {offsets = [0, 36], sizes = [1, 18], strides = [1, 1]} : vector<1x72xf32> to vector<1x18xf32>
    %cst_35 = arith.constant 2.000000e+00 : f32
    %143 = vector.broadcast %cst_35 : f32 to vector<1x18xf32>
    %144 = arith.mulf %143, %142 : vector<1x18xf32>
    %cst_36 = arith.constant 1.000000e+00 : f32
    %145 = vector.broadcast %cst_36 : f32 to vector<1x18xf32>
    %146 = arith.subf %144, %145 : vector<1x18xf32>
    %147 = vector.extract_strided_slice %139 {offsets = [0, 54], sizes = [1, 18], strides = [1, 1]} : vector<1x72xf32> to vector<1x18xf32>
    %148 = arith.mulf %141, %129 : vector<1x18xf32>
    %149 = arith.mulf %140, %146 : vector<1x18xf32>
    %150 = arith.addf %148, %149 : vector<1x18xf32>
    %151 = math.tanh %150 : vector<1x18xf32>
    %152 = arith.mulf %147, %151 : vector<1x18xf32>
    %153 = vector.extract_strided_slice %11 {offsets = [6, 0], sizes = [1, 72], strides = [1, 1]} : vector<8x72xf32> to vector<1x72xf32>
    %cst_37 = arith.constant dense<0.000000e+00> : vector<1x72xf32>
    %154 = tpu.matmul %152, %0, %cst_37 {dimension_numbers = #tpu.dot_dimension_numbers<[1], [0], [0], [1], [0, 0, 1, 1], [], []>} : vector<1x18xf32>, vector<18x72xf32>, vector<1x72xf32> -> vector<1x72xf32>
    %155 = arith.addf %153, %154 : vector<1x72xf32>
    %156 = arith.negf %155 : vector<1x72xf32>
    %157 = math.exp %156 : vector<1x72xf32>
    %cst_38 = arith.constant 1.000000e+00 : f32
    %158 = vector.broadcast %cst_38 : f32 to vector<1x72xf32>
    %159 = arith.addf %158, %157 : vector<1x72xf32>
    %160 = arith.divf %158, %159 : vector<1x72xf32>
    %161 = vector.extract_strided_slice %160 {offsets = [0, 0], sizes = [1, 18], strides = [1, 1]} : vector<1x72xf32> to vector<1x18xf32>
    %162 = vector.extract_strided_slice %160 {offsets = [0, 18], sizes = [1, 18], strides = [1, 1]} : vector<1x72xf32> to vector<1x18xf32>
    %163 = vector.extract_strided_slice %160 {offsets = [0, 36], sizes = [1, 18], strides = [1, 1]} : vector<1x72xf32> to vector<1x18xf32>
    %cst_39 = arith.constant 2.000000e+00 : f32
    %164 = vector.broadcast %cst_39 : f32 to vector<1x18xf32>
    %165 = arith.mulf %164, %163 : vector<1x18xf32>
    %cst_40 = arith.constant 1.000000e+00 : f32
    %166 = vector.broadcast %cst_40 : f32 to vector<1x18xf32>
    %167 = arith.subf %165, %166 : vector<1x18xf32>
    %168 = vector.extract_strided_slice %160 {offsets = [0, 54], sizes = [1, 18], strides = [1, 1]} : vector<1x72xf32> to vector<1x18xf32>
    %169 = arith.mulf %162, %150 : vector<1x18xf32>
    %170 = arith.mulf %161, %167 : vector<1x18xf32>
    %171 = arith.addf %169, %170 : vector<1x18xf32>
    %172 = math.tanh %171 : vector<1x18xf32>
    %173 = arith.mulf %168, %172 : vector<1x18xf32>
    %174 = vector.extract_strided_slice %11 {offsets = [7, 0], sizes = [1, 72], strides = [1, 1]} : vector<8x72xf32> to vector<1x72xf32>
    %cst_41 = arith.constant dense<0.000000e+00> : vector<1x72xf32>
    %175 = tpu.matmul %173, %0, %cst_41 {dimension_numbers = #tpu.dot_dimension_numbers<[1], [0], [0], [1], [0, 0, 1, 1], [], []>} : vector<1x18xf32>, vector<18x72xf32>, vector<1x72xf32> -> vector<1x72xf32>
    %176 = arith.addf %174, %175 : vector<1x72xf32>
    %177 = arith.negf %176 : vector<1x72xf32>
    %178 = math.exp %177 : vector<1x72xf32>
    %cst_42 = arith.constant 1.000000e+00 : f32
    %179 = vector.broadcast %cst_42 : f32 to vector<1x72xf32>
    %180 = arith.addf %179, %178 : vector<1x72xf32>
    %181 = arith.divf %179, %180 : vector<1x72xf32>
    %182 = vector.extract_strided_slice %181 {offsets = [0, 0], sizes = [1, 18], strides = [1, 1]} : vector<1x72xf32> to vector<1x18xf32>
    %183 = vector.extract_strided_slice %181 {offsets = [0, 18], sizes = [1, 18], strides = [1, 1]} : vector<1x72xf32> to vector<1x18xf32>
    %184 = vector.extract_strided_slice %181 {offsets = [0, 36], sizes = [1, 18], strides = [1, 1]} : vector<1x72xf32> to vector<1x18xf32>
    %cst_43 = arith.constant 2.000000e+00 : f32
    %185 = vector.broadcast %cst_43 : f32 to vector<1x18xf32>
    %186 = arith.mulf %185, %184 : vector<1x18xf32>
    %cst_44 = arith.constant 1.000000e+00 : f32
    %187 = vector.broadcast %cst_44 : f32 to vector<1x18xf32>
    %188 = arith.subf %186, %187 : vector<1x18xf32>
    %189 = vector.extract_strided_slice %181 {offsets = [0, 54], sizes = [1, 18], strides = [1, 1]} : vector<1x72xf32> to vector<1x18xf32>
    %190 = arith.mulf %183, %171 : vector<1x18xf32>
    %191 = arith.mulf %182, %188 : vector<1x18xf32>
    %192 = arith.addf %190, %191 : vector<1x18xf32>
    %193 = math.tanh %192 : vector<1x18xf32>
    %194 = arith.mulf %189, %193 : vector<1x18xf32>
    %cst_45 = arith.constant dense<0.000000e+00> : vector<1x72xf32>
    %195 = tpu.matmul %194, %0, %cst_45 {dimension_numbers = #tpu.dot_dimension_numbers<[1], [0], [0], [1], [0, 0, 1, 1], [], []>} : vector<1x18xf32>, vector<18x72xf32>, vector<1x72xf32> -> vector<1x72xf32>
    %196 = arith.addf %1, %195 : vector<1x72xf32>
    %197 = arith.negf %196 : vector<1x72xf32>
    %198 = math.exp %197 : vector<1x72xf32>
    %cst_46 = arith.constant 1.000000e+00 : f32
    %199 = vector.broadcast %cst_46 : f32 to vector<1x72xf32>
    %200 = arith.addf %199, %198 : vector<1x72xf32>
    %201 = arith.divf %199, %200 : vector<1x72xf32>
    %202 = vector.extract_strided_slice %201 {offsets = [0, 0], sizes = [1, 18], strides = [1, 1]} : vector<1x72xf32> to vector<1x18xf32>
    %203 = vector.extract_strided_slice %201 {offsets = [0, 18], sizes = [1, 18], strides = [1, 1]} : vector<1x72xf32> to vector<1x18xf32>
    %204 = vector.extract_strided_slice %201 {offsets = [0, 36], sizes = [1, 18], strides = [1, 1]} : vector<1x72xf32> to vector<1x18xf32>
    %cst_47 = arith.constant 2.000000e+00 : f32
    %205 = vector.broadcast %cst_47 : f32 to vector<1x18xf32>
    %206 = arith.mulf %205, %204 : vector<1x18xf32>
    %cst_48 = arith.constant 1.000000e+00 : f32
    %207 = vector.broadcast %cst_48 : f32 to vector<1x18xf32>
    %208 = arith.subf %206, %207 : vector<1x18xf32>
    %209 = vector.extract_strided_slice %201 {offsets = [0, 54], sizes = [1, 18], strides = [1, 1]} : vector<1x72xf32> to vector<1x18xf32>
    %210 = arith.mulf %203, %192 : vector<1x18xf32>
    %211 = arith.mulf %202, %208 : vector<1x18xf32>
    %212 = arith.addf %210, %211 : vector<1x18xf32>
    %213 = math.tanh %212 : vector<1x18xf32>
    %214 = arith.mulf %209, %213 : vector<1x18xf32>
    %cst_49 = arith.constant dense<0.000000e+00> : vector<1x72xf32>
    %215 = tpu.matmul %214, %0, %cst_49 {dimension_numbers = #tpu.dot_dimension_numbers<[1], [0], [0], [1], [0, 0, 1, 1], [], []>} : vector<1x18xf32>, vector<18x72xf32>, vector<1x72xf32> -> vector<1x72xf32>
    %216 = arith.addf %1, %215 : vector<1x72xf32>
    %217 = arith.negf %216 : vector<1x72xf32>
    %218 = math.exp %217 : vector<1x72xf32>
    %cst_50 = arith.constant 1.000000e+00 : f32
    %219 = vector.broadcast %cst_50 : f32 to vector<1x72xf32>
    %220 = arith.addf %219, %218 : vector<1x72xf32>
    %221 = arith.divf %219, %220 : vector<1x72xf32>
    %222 = vector.extract_strided_slice %221 {offsets = [0, 0], sizes = [1, 18], strides = [1, 1]} : vector<1x72xf32> to vector<1x18xf32>
    %223 = vector.extract_strided_slice %221 {offsets = [0, 18], sizes = [1, 18], strides = [1, 1]} : vector<1x72xf32> to vector<1x18xf32>
    %224 = vector.extract_strided_slice %221 {offsets = [0, 36], sizes = [1, 18], strides = [1, 1]} : vector<1x72xf32> to vector<1x18xf32>
    %cst_51 = arith.constant 2.000000e+00 : f32
    %225 = vector.broadcast %cst_51 : f32 to vector<1x18xf32>
    %226 = arith.mulf %225, %224 : vector<1x18xf32>
    %cst_52 = arith.constant 1.000000e+00 : f32
    %227 = vector.broadcast %cst_52 : f32 to vector<1x18xf32>
    %228 = arith.subf %226, %227 : vector<1x18xf32>
    %229 = vector.extract_strided_slice %221 {offsets = [0, 54], sizes = [1, 18], strides = [1, 1]} : vector<1x72xf32> to vector<1x18xf32>
    %230 = arith.mulf %223, %212 : vector<1x18xf32>
    %231 = arith.mulf %222, %228 : vector<1x18xf32>
    %232 = arith.addf %230, %231 : vector<1x18xf32>
    %233 = math.tanh %232 : vector<1x18xf32>
    %234 = arith.mulf %229, %233 : vector<1x18xf32>
    %235 = arith.mulf %234, %3 : vector<1x18xf32>
    %cst_53 = arith.constant dense<0.000000e+00> : vector<1xf32>
    %236 = vector.multi_reduction <add>, %235, %cst_53 [1] : vector<1x18xf32> to vector<1xf32>
    %237 = vector.shape_cast %236 : vector<1xf32> to vector<1x1xf32>
    %238 = arith.addf %237, %4 : vector<1x1xf32>
    %c0_54 = arith.constant 0 : index
    %c0_55 = arith.constant 0 : index
    %239 = vector.load %arg2[%c0_54, %c0_55] : memref<1x1xf32, #tpu.memory_space<vmem>>, vector<1x1xf32>
    tpu.vector_store %arg2[%c0_54, %c0_55], %238 {strides = array<i32>} : memref<1x1xf32, #tpu.memory_space<vmem>>, vector<1x1xf32>,
    return
  }
}

</mosaic_0001>

<llo_original>
// kernel: forward.1
$region0: #{forward.1}
  #allocation0 [shape = 'u32[]', space=smem, size = 0x4, offset = 0x4, fixed_abs, tag = 'smem constant byte address 0x4 - core index']
  #allocation1 [shape = 'u32[144,128]{1,0:T(1,128)}', space=vmem, size = 0x12000, scoped, tag = 'internal scratch']
  %s0 = inlined_call_operand.vmem [shape: f32[1,8,1], index: 0, kind: input, shape index: {}]
  %s1 = inlined_call_operand.hbm [shape: f32[22,72], index: 1, kind: input, shape index: {}]
  %s2 = inlined_call_operand.hbm [shape: f32[1,1], index: 2, kind: output, shape index: {}]
  %s3 = sld [smem:[#allocation0]]
  $region22: #{forward.1} parent=0
    _
  %s5 = ssub.s32 1, %s3
  %s6 = scalar_select 0, %s5, %s3
  $region1: #{forward.1} parent=0
    #allocation2 [shape = 'u8[12288]{0}', space=vmem, size = 0x3000, scoped, tag = 'input window, operand 1, single buffered']
    #allocation3 [shape = 's32[1]{0}', space=sflag, size = 0x4, scoped, tag = 'scoped memory for forward.1']
    #allocation4 [shape = 's32[1]{0}', space=sflag, size = 0x4, scoped, tag = 'scoped memory for forward.1']
    #allocation5 [shape = 'u8[512]{0}', space=vmem, size = 0x400, scoped, tag = 'output window, operand 0, single buffered']
    %7 = vsyncpa [#allocation3], 0
    %8 = vsyncpa [#allocation4], 0
    // Predicated region
    $region2: #{forward.1} parent=1 // pred_check
      _
    $region3: #{forward.1} parent=1 // pred_check_branch
      %10 = sbr.rel (0) target = $region5
    $region4: #{forward.1} parent=1 // pred_region
      _
    $region5: #{forward.1} parent=1 // pred_fallthru
      _
    // Predicated region
    $region6: #{forward.1} parent=1 // pred_check
      _
    $region7: #{forward.1} parent=1 // pred_check_branch
      %12 = sbr.rel (0) target = $region9
    $region8: #{forward.1} parent=1 // pred_region
      %s14 = ssub.s32 384, 384
      %15 = vsyncadd [#allocation3], %s14
      %s16 = sshll.u32 [#allocation2], 4
      %s17 = int_to_ptr.vmem [resolvable:$true] %s16
      %22 = dma.hbm_to_vmem [thread:$0]  %s1, 384, %s17, [#allocation3], 128, 128, 8
    $region9: #{forward.1} parent=1 // pred_fallthru
      _
    // Predicated region
    $region10: #{forward.1} parent=1 // pred_check
      _
    $region11: #{forward.1} parent=1 // pred_check_branch
      %24 = sbr.rel (0) target = $region13
    $region12: #{forward.1} parent=1 // pred_region
      %25 = dma.done [#allocation3], 384
    $region13: #{forward.1} parent=1 // pred_fallthru
      _
    %v26 = vld [vmem:[#allocation2] sm:$0xff]
    %v27 = vld [vmem:[#allocation2 + $0x8] sm:$0xff]
    %v28 = vld [vmem:[#allocation2 + $0x10] sm:$0x3]
    %v29 = vld [vmem:[#allocation2 + $0x12] sm:$0x1]
    %v30 = vld [vmem:[#allocation2 + $0x13] sm:$0x1]
    %v31 = vld [vmem:[#allocation2 + $0x14] sm:$0x1]
    %v32 = vld [vmem:[#allocation2 + $0x15] sm:$0x1]
    %v33 = vld [vmem:[%s0] sm:$0xff]
    %35 = vset.pattern.permute.xlu0 0
    %36 = vperm.xlu0 %35, %v33
    %v37 = vpop.permute.xlu0 %36
    %v39 = vlaneseq
    %v40 = vshrl.u32 %v39, 7
    %v41 = vsub.s32 0, %v40
    %v42 = vrot.slane %v30, %v41
    %v43 = vmul.f32 %v37, %v42
    %v44 = vlaneseq
    %v45 = vshrl.u32 %v44, 7
    %v46 = vsub.s32 0, %v45
    %v47 = vrot.slane %v29, %v46
    %v48 = vadd.f32 %v43, %v47
    %v49 = vlaneseq
    %v50 = vand.u32 %v49, 127
    %vm51 = vcmask 146432
    %v53 = vsel %vm51, 0.0, 0
    %vm55 = vcmask 1041408
    %v57 = vsel %vm55, %v28, 0
    %59 = vmatprep.subr.mxu0 0.0
    %60 = vmatpush1.msra.mxu0 0.0
    %61 = vmatprep.subr.mxu0 0.0
    %62 = vmatpush1.msra.mxu0 0.0
    %63 = vmatprep.subr.mxu0 0.0
    %64 = vmatpush1.msra.mxu0 0.0
    %65 = vmatprep.subr.mxu0 0.0
    %66 = vmatpush1.msra.mxu0 0.0
    %67 = vmatprep.subr.mxu0 0.0
    %68 = vmatpush1.msra.mxu0 0.0
    %69 = vmatprep.subr.mxu0 0.0
    %70 = vmatpush1.msra.mxu0 0.0
    %71 = vmatprep.subr.mxu0 0.0
    %72 = vmatpush1.msra.mxu0 0.0
    %73 = vmatprep.subr.mxu0 0.0
    %74 = vmatpush1.msra.mxu0 0.0
    %75 = vmatprep.subr.mxu0 0.0
    %76 = vmatpush1.msra.mxu0 0.0
    %77 = vmatprep.subr.mxu0 0.0
    %78 = vmatpush1.msra.mxu0 0.0
    %79 = vmatprep.subr.mxu0 0.0
    %80 = vmatpush1.msra.mxu0 0.0
    %81 = vmatprep.subr.mxu0 0.0
    %82 = vmatpush1.msra.mxu0 0.0
    %83 = vmatprep.subr.mxu0 0.0
    %84 = vmatpush1.msra.mxu0 0.0
    %85 = vmatprep.subr.mxu0 0.0
    %86 = vmatpush1.msra.mxu0 %v57
    %87 = vmatprep.subr.mxu0 0.0
    %88 = vmatpush1.msra.mxu0 %v27
    %89 = vmatprep.subr.mxu0 0.0
    %90 = vmatpush1.msra.mxu0 %v26
    %91 = vmatprep.subr.mxu0 0.0
    %92 = vmatpush2.msra.mxu0 0.0
    %93 = vmatprep.subr.mxu0 0.0
    %94 = vmatpush2.msra.mxu0 0.0
    %95 = vmatprep.subr.mxu0 0.0
    %96 = vmatpush2.msra.mxu0 0.0
    %97 = vmatprep.subr.mxu0 0.0
    %98 = vmatpush2.msra.mxu0 0.0
    %99 = vmatprep.subr.mxu0 0.0
    %100 = vmatpush2.msra.mxu0 0.0
    %101 = vmatprep.subr.mxu0 0.0
    %102 = vmatpush2.msra.mxu0 0.0
    %103 = vmatprep.subr.mxu0 0.0
    %104 = vmatpush2.msra.mxu0 0.0
    %105 = vmatprep.subr.mxu0 0.0
    %106 = vmatpush2.msra.mxu0 0.0
    %107 = vmatprep.subr.mxu0 0.0
    %108 = vmatpush2.msra.mxu0 0.0
    %109 = vmatprep.subr.mxu0 0.0
    %110 = vmatpush2.msra.mxu0 0.0
    %111 = vmatprep.subr.mxu0 0.0
    %112 = vmatpush2.msra.mxu0 0.0
    %113 = vmatprep.subr.mxu0 0.0
    %114 = vmatpush2.msra.mxu0 0.0
    %115 = vmatprep.subr.mxu0 0.0
    %116 = vmatpush2.msra.mxu0 0.0
    %117 = vmatprep.subr.mxu0 0.0
    %118 = vmatpush2.msra.mxu0 0.0
    %119 = vmatprep.subr.mxu0 0.0
    %120 = vmatpush2.msra.mxu0 0.0
    %121 = vmatprep.subr.mxu0 0.0
    %122 = vmatpush2.msra.mxu0 0.0
    %123 = vmatprep.mubr.f32.mxu0 0.0
    %124 = vmatmul.mubr.f32.gmra.mxu0 %v53
    %v125 = vpop.f32.mrf.mxu0
    %v126 = vadd.f32 0.0, %v125
    %v127 = vpop.f32.mrf.mxu0
    %128 = vdwg.mxu0
    %v129 = vadd.f32 %v48, %v126
    %v130 = vxor.u32 %v129, 2147483648
    %v131 = vmul.f32 %v130, 1.442695
    %v132 = vpow.pop %v131
    %v133 = vadd.f32 %v132, 1.0
    %v134 = vrcp.pop %v133
    %v135 = vmul.f32 1.0, %v134
    %v136 = vmul.f32 %v135, 2.0
    %v137 = vsub.f32 %v136, 1.0
    %v138 = vmul.f32 %v135, 0.0
    %140 = vrot.lane.b32.xlu0 %v137, 92
    %v141 = vpop.permute.xlu0 %140
    %v143 = vmul.f32 %v135, %v141
    %145 = vrot.lane.b32.xlu0 %v143, 18
    %v146 = vpop.permute.xlu0 %145
    %v148 = vadd.f32 %v138, %v146
    %v149 = vtanh.pop %v148
    %151 = vrot.lane.b32.xlu0 %v149, 36
    %v152 = vpop.permute.xlu0 %151
    %v154 = vmul.f32 %v135, %v152
    %vm155 = vcmp.lt.s32.totalorder %v50, 6
    %157 = vrot.lane.b32.xlu0 %v148, 110
    %v158 = vpop.permute.xlu0 %157
    %v160 = vsel %vm155, %v158, 0.0
    %162 = vrot.lane.b32.xlu0 %v154, 74
    %v163 = vpop.permute.xlu0 %162
    %v165 = vsel %vm155, %v163, 0.0
    %v167 = vsel %vm51, %v165, 0
    %169 = vmatprep.subr.mxu0 0.0
    %170 = vmatpush1.msra.mxu0 0.0
    %171 = vmatprep.subr.mxu0 0.0
    %172 = vmatpush1.msra.mxu0 0.0
    %173 = vmatprep.subr.mxu0 0.0
    %174 = vmatpush1.msra.mxu0 0.0
    %175 = vmatprep.subr.mxu0 0.0
    %176 = vmatpush1.msra.mxu0 0.0
    %177 = vmatprep.subr.mxu0 0.0
    %178 = vmatpush1.msra.mxu0 0.0
    %179 = vmatprep.subr.mxu0 0.0
    %180 = vmatpush1.msra.mxu0 0.0
    %181 = vmatprep.subr.mxu0 0.0
    %182 = vmatpush1.msra.mxu0 0.0
    %183 = vmatprep.subr.mxu0 0.0
    %184 = vmatpush1.msra.mxu0 0.0
    %185 = vmatprep.subr.mxu0 0.0
    %186 = vmatpush1.msra.mxu0 0.0
    %187 = vmatprep.subr.mxu0 0.0
    %188 = vmatpush1.msra.mxu0 0.0
    %189 = vmatprep.subr.mxu0 0.0
    %190 = vmatpush1.msra.mxu0 0.0
    %191 = vmatprep.subr.mxu0 0.0
    %192 = vmatpush1.msra.mxu0 0.0
    %193 = vmatprep.subr.mxu0 0.0
    %194 = vmatpush1.msra.mxu0 0.0
    %195 = vmatprep.subr.mxu0 0.0
    %196 = vmatpush1.msra.mxu0 %v57
    %197 = vmatprep.subr.mxu0 0.0
    %198 = vmatpush1.msra.mxu0 %v27
    %199 = vmatprep.subr.mxu0 0.0
    %200 = vmatpush1.msra.mxu0 %v26
    %201 = vmatprep.subr.mxu0 0.0
    %202 = vmatpush2.msra.mxu0 0.0
    %203 = vmatprep.subr.mxu0 0.0
    %204 = vmatpush2.msra.mxu0 0.0
    %205 = vmatprep.subr.mxu0 0.0
    %206 = vmatpush2.msra.mxu0 0.0
    %207 = vmatprep.subr.mxu0 0.0
    %208 = vmatpush2.msra.mxu0 0.0
    %209 = vmatprep.subr.mxu0 0.0
    %210 = vmatpush2.msra.mxu0 0.0
    %211 = vmatprep.subr.mxu0 0.0
    %212 = vmatpush2.msra.mxu0 0.0
    %213 = vmatprep.subr.mxu0 0.0
    %214 = vmatpush2.msra.mxu0 0.0
    %215 = vmatprep.subr.mxu0 0.0
    %216 = vmatpush2.msra.mxu0 0.0
    %217 = vmatprep.subr.mxu0 0.0
    %218 = vmatpush2.msra.mxu0 0.0
    %219 = vmatprep.subr.mxu0 0.0
    %220 = vmatpush2.msra.mxu0 0.0
    %221 = vmatprep.subr.mxu0 0.0
    %222 = vmatpush2.msra.mxu0 0.0
    %223 = vmatprep.subr.mxu0 0.0
    %224 = vmatpush2.msra.mxu0 0.0
    %225 = vmatprep.subr.mxu0 0.0
    %226 = vmatpush2.msra.mxu0 0.0
    %227 = vmatprep.subr.mxu0 0.0
    %228 = vmatpush2.msra.mxu0 0.0
    %229 = vmatprep.subr.mxu0 0.0
    %230 = vmatpush2.msra.mxu0 0.0
    %231 = vmatprep.subr.mxu0 0.0
    %232 = vmatpush2.msra.mxu0 0.0
    %233 = vmatprep.mubr.f32.mxu0 0.0
    %234 = vmatmul.mubr.f32.gmra.mxu0 %v167
    %v235 = vpop.f32.mrf.mxu0
    %v236 = vadd.f32 0.0, %v235
    %v237 = vpop.f32.mrf.mxu0
    %238 = vdwg.mxu0
    %v240 = vrot.slane %v236, 7
    %v242 = vadd.f32 %v48, %v240
    %v243 = vxor.u32 %v242, 2147483648
    %v244 = vmul.f32 %v243, 1.442695
    %v245 = vpow.pop %v244
    %v246 = vadd.f32 %v245, 1.0
    %v247 = vrcp.pop %v246
    %v248 = vmul.f32 1.0, %v247
    %v249 = vmul.f32 %v248, 2.0
    %v250 = vsub.f32 %v249, 1.0
    %v252 = vrot.slane %v160, 7
    %253 = vrot.lane.b32.xlu0 %v252, 18
    %v254 = vpop.permute.xlu0 %253
    %v256 = vmul.f32 %v248, %v254
    %258 = vrot.lane.b32.xlu0 %v250, 92
    %v259 = vpop.permute.xlu0 %258
    %v261 = vmul.f32 %v248, %v259
    %263 = vrot.lane.b32.xlu0 %v261, 18
    %v264 = vpop.permute.xlu0 %263
    %v266 = vadd.f32 %v256, %v264
    %v267 = vtanh.pop %v266
    %269 = vrot.lane.b32.xlu0 %v267, 36
    %v270 = vpop.permute.xlu0 %269
    %v272 = vmul.f32 %v248, %v270
    %vm273 = vcmp.lt.s32.totalorder %v50, 12
    %v275 = vrot.slane %v266, 1
    %276 = vrot.lane.b32.xlu0 %v275, 110
    %v277 = vpop.permute.xlu0 %276
    %v279 = vsel %vm273, %v277, 0.0
    %v281 = vrot.slane %v272, 1
    %282 = vrot.lane.b32.xlu0 %v281, 74
    %v283 = vpop.permute.xlu0 %282
    %v285 = vsel %vm273, %v283, 0.0
    %v287 = vsel %vm51, %v285, 0
    %289 = vmatprep.subr.mxu0 0.0
    %290 = vmatpush1.msra.mxu0 0.0
    %291 = vmatprep.subr.mxu0 0.0
    %292 = vmatpush1.msra.mxu0 0.0
    %293 = vmatprep.subr.mxu0 0.0
    %294 = vmatpush1.msra.mxu0 0.0
    %295 = vmatprep.subr.mxu0 0.0
    %296 = vmatpush1.msra.mxu0 0.0
    %297 = vmatprep.subr.mxu0 0.0
    %298 = vmatpush1.msra.mxu0 0.0
    %299 = vmatprep.subr.mxu0 0.0
    %300 = vmatpush1.msra.mxu0 0.0
    %301 = vmatprep.subr.mxu0 0.0
    %302 = vmatpush1.msra.mxu0 0.0
    %303 = vmatprep.subr.mxu0 0.0
    %304 = vmatpush1.msra.mxu0 0.0
    %305 = vmatprep.subr.mxu0 0.0
    %306 = vmatpush1.msra.mxu0 0.0
    %307 = vmatprep.subr.mxu0 0.0
    %308 = vmatpush1.msra.mxu0 0.0
    %309 = vmatprep.subr.mxu0 0.0
    %310 = vmatpush1.msra.mxu0 0.0
    %311 = vmatprep.subr.mxu0 0.0
    %312 = vmatpush1.msra.mxu0 0.0
    %313 = vmatprep.subr.mxu0 0.0
    %314 = vmatpush1.msra.mxu0 0.0
    %315 = vmatprep.subr.mxu0 0.0
    %316 = vmatpush1.msra.mxu0 %v57
    %317 = vmatprep.subr.mxu0 0.0
    %318 = vmatpush1.msra.mxu0 %v27
    %319 = vmatprep.subr.mxu0 0.0
    %320 = vmatpush1.msra.mxu0 %v26
    %321 = vmatprep.subr.mxu0 0.0
    %322 = vmatpush2.msra.mxu0 0.0
    %323 = vmatprep.subr.mxu0 0.0
    %324 = vmatpush2.msra.mxu0 0.0
    %325 = vmatprep.subr.mxu0 0.0
    %326 = vmatpush2.msra.mxu0 0.0
    %327 = vmatprep.subr.mxu0 0.0
    %328 = vmatpush2.msra.mxu0 0.0
    %329 = vmatprep.subr.mxu0 0.0
    %330 = vmatpush2.msra.mxu0 0.0
    %331 = vmatprep.subr.mxu0 0.0
    %332 = vmatpush2.msra.mxu0 0.0
    %333 = vmatprep.subr.mxu0 0.0
    %334 = vmatpush2.msra.mxu0 0.0
    %335 = vmatprep.subr.mxu0 0.0
    %336 = vmatpush2.msra.mxu0 0.0
    %337 = vmatprep.subr.mxu0 0.0
    %338 = vmatpush2.msra.mxu0 0.0
    %339 = vmatprep.subr.mxu0 0.0
    %340 = vmatpush2.msra.mxu0 0.0
    %341 = vmatprep.subr.mxu0 0.0
    %342 = vmatpush2.msra.mxu0 0.0
    %343 = vmatprep.subr.mxu0 0.0
    %344 = vmatpush2.msra.mxu0 0.0
    %345 = vmatprep.subr.mxu0 0.0
    %346 = vmatpush2.msra.mxu0 0.0
    %347 = vmatprep.subr.mxu0 0.0
    %348 = vmatpush2.msra.mxu0 0.0
    %349 = vmatprep.subr.mxu0 0.0
    %350 = vmatpush2.msra.mxu0 0.0
    %351 = vmatprep.subr.mxu0 0.0
    %352 = vmatpush2.msra.mxu0 0.0
    %353 = vmatprep.mubr.f32.mxu0 0.0
    %354 = vmatmul.mubr.f32.gmra.mxu0 %v287
    %v355 = vpop.f32.mrf.mxu0
    %v356 = vadd.f32 0.0, %v355
    %v357 = vpop.f32.mrf.mxu0
    %358 = vdwg.mxu0
    %v360 = vrot.slane %v356, 6
    %v362 = vadd.f32 %v48, %v360
    %v363 = vxor.u32 %v362, 2147483648
    %v364 = vmul.f32 %v363, 1.442695
    %v365 = vpow.pop %v364
    %v366 = vadd.f32 %v365, 1.0
    %v367 = vrcp.pop %v366
    %v368 = vmul.f32 1.0, %v367
    %v369 = vmul.f32 %v368, 2.0
    %v370 = vsub.f32 %v369, 1.0
    %v372 = vrot.slane %v279, 6
    %373 = vrot.lane.b32.xlu0 %v372, 18
    %v374 = vpop.permute.xlu0 %373
    %v376 = vmul.f32 %v368, %v374
    %378 = vrot.lane.b32.xlu0 %v370, 92
    %v379 = vpop.permute.xlu0 %378
    %v381 = vmul.f32 %v368, %v379
    %383 = vrot.lane.b32.xlu0 %v381, 18
    %v384 = vpop.permute.xlu0 %383
    %v386 = vadd.f32 %v376, %v384
    %v387 = vtanh.pop %v386
    %389 = vrot.lane.b32.xlu0 %v387, 36
    %v390 = vpop.permute.xlu0 %389
    %v392 = vmul.f32 %v368, %v390
    %v394 = vrot.slane %v392, 2
    %395 = vrot.lane.b32.xlu0 %v394, 74
    %v396 = vpop.permute.xlu0 %395
    %v397 = vsel %vm51, %v396, 0
    %399 = vmatprep.subr.mxu0 0.0
    %400 = vmatpush1.msra.mxu0 0.0
    %401 = vmatprep.subr.mxu0 0.0
    %402 = vmatpush1.msra.mxu0 0.0
    %403 = vmatprep.subr.mxu0 0.0
    %404 = vmatpush1.msra.mxu0 0.0
    %405 = vmatprep.subr.mxu0 0.0
    %406 = vmatpush1.msra.mxu0 0.0
    %407 = vmatprep.subr.mxu0 0.0
    %408 = vmatpush1.msra.mxu0 0.0
    %409 = vmatprep.subr.mxu0 0.0
    %410 = vmatpush1.msra.mxu0 0.0
    %411 = vmatprep.subr.mxu0 0.0
    %412 = vmatpush1.msra.mxu0 0.0
    %413 = vmatprep.subr.mxu0 0.0
    %414 = vmatpush1.msra.mxu0 0.0
    %415 = vmatprep.subr.mxu0 0.0
    %416 = vmatpush1.msra.mxu0 0.0
    %417 = vmatprep.subr.mxu0 0.0
    %418 = vmatpush1.msra.mxu0 0.0
    %419 = vmatprep.subr.mxu0 0.0
    %420 = vmatpush1.msra.mxu0 0.0
    %421 = vmatprep.subr.mxu0 0.0
    %422 = vmatpush1.msra.mxu0 0.0
    %423 = vmatprep.subr.mxu0 0.0
    %424 = vmatpush1.msra.mxu0 0.0
    %425 = vmatprep.subr.mxu0 0.0
    %426 = vmatpush1.msra.mxu0 %v57
    %427 = vmatprep.subr.mxu0 0.0
    %428 = vmatpush1.msra.mxu0 %v27
    %429 = vmatprep.subr.mxu0 0.0
    %430 = vmatpush1.msra.mxu0 %v26
    %431 = vmatprep.subr.mxu0 0.0
    %432 = vmatpush2.msra.mxu0 0.0
    %433 = vmatprep.subr.mxu0 0.0
    %434 = vmatpush2.msra.mxu0 0.0
    %435 = vmatprep.subr.mxu0 0.0
    %436 = vmatpush2.msra.mxu0 0.0
    %437 = vmatprep.subr.mxu0 0.0
    %438 = vmatpush2.msra.mxu0 0.0
    %439 = vmatprep.subr.mxu0 0.0
    %440 = vmatpush2.msra.mxu0 0.0
    %441 = vmatprep.subr.mxu0 0.0
    %442 = vmatpush2.msra.mxu0 0.0
    %443 = vmatprep.subr.mxu0 0.0
    %444 = vmatpush2.msra.mxu0 0.0
    %445 = vmatprep.subr.mxu0 0.0
    %446 = vmatpush2.msra.mxu0 0.0
    %447 = vmatprep.subr.mxu0 0.0
    %448 = vmatpush2.msra.mxu0 0.0
    %449 = vmatprep.subr.mxu0 0.0
    %450 = vmatpush2.msra.mxu0 0.0
    %451 = vmatprep.subr.mxu0 0.0
    %452 = vmatpush2.msra.mxu0 0.0
    %453 = vmatprep.subr.mxu0 0.0
    %454 = vmatpush2.msra.mxu0 0.0
    %455 = vmatprep.subr.mxu0 0.0
    %456 = vmatpush2.msra.mxu0 0.0
    %457 = vmatprep.subr.mxu0 0.0
    %458 = vmatpush2.msra.mxu0 0.0
    %459 = vmatprep.subr.mxu0 0.0
    %460 = vmatpush2.msra.mxu0 0.0
    %461 = vmatprep.subr.mxu0 0.0
    %462 = vmatpush2.msra.mxu0 0.0
    %463 = vmatprep.mubr.f32.mxu0 0.0
    %464 = vmatmul.mubr.f32.gmra.mxu0 %v397
    %v465 = vpop.f32.mrf.mxu0
    %v466 = vadd.f32 0.0, %v465
    %v467 = vpop.f32.mrf.mxu0
    %468 = vdwg.mxu0
    %v470 = vrot.slane %v466, 5
    %v472 = vadd.f32 %v48, %v470
    %v473 = vxor.u32 %v472, 2147483648
    %v474 = vmul.f32 %v473, 1.442695
    %v475 = vpow.pop %v474
    %v476 = vadd.f32 %v475, 1.0
    %v477 = vrcp.pop %v476
    %v478 = vmul.f32 1.0, %v477
    %v479 = vmul.f32 %v478, 2.0
    %v480 = vsub.f32 %v479, 1.0
    %v482 = vrot.slane %v386, 7
    %v484 = vmul.f32 %v478, %v482
    %486 = vrot.lane.b32.xlu0 %v480, 92
    %v487 = vpop.permute.xlu0 %486
    %v489 = vmul.f32 %v478, %v487
    %491 = vrot.lane.b32.xlu0 %v489, 18
    %v492 = vpop.permute.xlu0 %491
    %v494 = vadd.f32 %v484, %v492
    %v495 = vtanh.pop %v494
    %497 = vrot.lane.b32.xlu0 %v495, 36
    %v498 = vpop.permute.xlu0 %497
    %v500 = vmul.f32 %v478, %v498
    %v502 = vrot.slane %v500, 3
    %503 = vrot.lane.b32.xlu0 %v502, 74
    %v504 = vpop.permute.xlu0 %503
    %v505 = vsel %vm51, %v504, 0
    %507 = vmatprep.subr.mxu0 0.0
    %508 = vmatpush1.msra.mxu0 0.0
    %509 = vmatprep.subr.mxu0 0.0
    %510 = vmatpush1.msra.mxu0 0.0
    %511 = vmatprep.subr.mxu0 0.0
    %512 = vmatpush1.msra.mxu0 0.0
    %513 = vmatprep.subr.mxu0 0.0
    %514 = vmatpush1.msra.mxu0 0.0
    %515 = vmatprep.subr.mxu0 0.0
    %516 = vmatpush1.msra.mxu0 0.0
    %517 = vmatprep.subr.mxu0 0.0
    %518 = vmatpush1.msra.mxu0 0.0
    %519 = vmatprep.subr.mxu0 0.0
    %520 = vmatpush1.msra.mxu0 0.0
    %521 = vmatprep.subr.mxu0 0.0
    %522 = vmatpush1.msra.mxu0 0.0
    %523 = vmatprep.subr.mxu0 0.0
    %524 = vmatpush1.msra.mxu0 0.0
    %525 = vmatprep.subr.mxu0 0.0
    %526 = vmatpush1.msra.mxu0 0.0
    %527 = vmatprep.subr.mxu0 0.0
    %528 = vmatpush1.msra.mxu0 0.0
    %529 = vmatprep.subr.mxu0 0.0
    %530 = vmatpush1.msra.mxu0 0.0
    %531 = vmatprep.subr.mxu0 0.0
    %532 = vmatpush1.msra.mxu0 0.0
    %533 = vmatprep.subr.mxu0 0.0
    %534 = vmatpush1.msra.mxu0 %v57
    %535 = vmatprep.subr.mxu0 0.0
    %536 = vmatpush1.msra.mxu0 %v27
    %537 = vmatprep.subr.mxu0 0.0
    %538 = vmatpush1.msra.mxu0 %v26
    %539 = vmatprep.subr.mxu0 0.0
    %540 = vmatpush2.msra.mxu0 0.0
    %541 = vmatprep.subr.mxu0 0.0
    %542 = vmatpush2.msra.mxu0 0.0
    %543 = vmatprep.subr.mxu0 0.0
    %544 = vmatpush2.msra.mxu0 0.0
    %545 = vmatprep.subr.mxu0 0.0
    %546 = vmatpush2.msra.mxu0 0.0
    %547 = vmatprep.subr.mxu0 0.0
    %548 = vmatpush2.msra.mxu0 0.0
    %549 = vmatprep.subr.mxu0 0.0
    %550 = vmatpush2.msra.mxu0 0.0
    %551 = vmatprep.subr.mxu0 0.0
    %552 = vmatpush2.msra.mxu0 0.0
    %553 = vmatprep.subr.mxu0 0.0
    %554 = vmatpush2.msra.mxu0 0.0
    %555 = vmatprep.subr.mxu0 0.0
    %556 = vmatpush2.msra.mxu0 0.0
    %557 = vmatprep.subr.mxu0 0.0
    %558 = vmatpush2.msra.mxu0 0.0
    %559 = vmatprep.subr.mxu0 0.0
    %560 = vmatpush2.msra.mxu0 0.0
    %561 = vmatprep.subr.mxu0 0.0
    %562 = vmatpush2.msra.mxu0 0.0
    %563 = vmatprep.subr.mxu0 0.0
    %564 = vmatpush2.msra.mxu0 0.0
    %565 = vmatprep.subr.mxu0 0.0
    %566 = vmatpush2.msra.mxu0 0.0
    %567 = vmatprep.subr.mxu0 0.0
    %568 = vmatpush2.msra.mxu0 0.0
    %569 = vmatprep.subr.mxu0 0.0
    %570 = vmatpush2.msra.mxu0 0.0
    %571 = vmatprep.mubr.f32.mxu0 0.0
    %572 = vmatmul.mubr.f32.gmra.mxu0 %v505
    %v573 = vpop.f32.mrf.mxu0
    %v574 = vadd.f32 0.0, %v573
    %v575 = vpop.f32.mrf.mxu0
    %576 = vdwg.mxu0
    %v578 = vrot.slane %v574, 4
    %v580 = vadd.f32 %v48, %v578
    %v581 = vxor.u32 %v580, 2147483648
    %v582 = vmul.f32 %v581, 1.442695
    %v583 = vpow.pop %v582
    %v584 = vadd.f32 %v583, 1.0
    %v585 = vrcp.pop %v584
    %v586 = vmul.f32 1.0, %v585
    %v587 = vmul.f32 %v586, 2.0
    %v588 = vsub.f32 %v587, 1.0
    %v590 = vrot.slane %v494, 7
    %v592 = vmul.f32 %v586, %v590
    %594 = vrot.lane.b32.xlu0 %v588, 92
    %v595 = vpop.permute.xlu0 %594
    %v597 = vmul.f32 %v586, %v595
    %599 = vrot.lane.b32.xlu0 %v597, 18
    %v600 = vpop.permute.xlu0 %599
    %v602 = vadd.f32 %v592, %v600
    %v603 = vtanh.pop %v602
    %605 = vrot.lane.b32.xlu0 %v603, 36
    %v606 = vpop.permute.xlu0 %605
    %v608 = vmul.f32 %v586, %v606
    %v610 = vrot.slane %v608, 4
    %611 = vrot.lane.b32.xlu0 %v610, 74
    %v612 = vpop.permute.xlu0 %611
    %v613 = vsel %vm51, %v612, 0
    %615 = vmatprep.subr.mxu0 0.0
    %616 = vmatpush1.msra.mxu0 0.0
    %617 = vmatprep.subr.mxu0 0.0
    %618 = vmatpush1.msra.mxu0 0.0
    %619 = vmatprep.subr.mxu0 0.0
    %620 = vmatpush1.msra.mxu0 0.0
    %621 = vmatprep.subr.mxu0 0.0
    %622 = vmatpush1.msra.mxu0 0.0
    %623 = vmatprep.subr.mxu0 0.0
    %624 = vmatpush1.msra.mxu0 0.0
    %625 = vmatprep.subr.mxu0 0.0
    %626 = vmatpush1.msra.mxu0 0.0
    %627 = vmatprep.subr.mxu0 0.0
    %628 = vmatpush1.msra.mxu0 0.0
    %629 = vmatprep.subr.mxu0 0.0
    %630 = vmatpush1.msra.mxu0 0.0
    %631 = vmatprep.subr.mxu0 0.0
    %632 = vmatpush1.msra.mxu0 0.0
    %633 = vmatprep.subr.mxu0 0.0
    %634 = vmatpush1.msra.mxu0 0.0
    %635 = vmatprep.subr.mxu0 0.0
    %636 = vmatpush1.msra.mxu0 0.0
    %637 = vmatprep.subr.mxu0 0.0
    %638 = vmatpush1.msra.mxu0 0.0
    %639 = vmatprep.subr.mxu0 0.0
    %640 = vmatpush1.msra.mxu0 0.0
    %641 = vmatprep.subr.mxu0 0.0
    %642 = vmatpush1.msra.mxu0 %v57
    %643 = vmatprep.subr.mxu0 0.0
    %644 = vmatpush1.msra.mxu0 %v27
    %645 = vmatprep.subr.mxu0 0.0
    %646 = vmatpush1.msra.mxu0 %v26
    %647 = vmatprep.subr.mxu0 0.0
    %648 = vmatpush2.msra.mxu0 0.0
    %649 = vmatprep.subr.mxu0 0.0
    %650 = vmatpush2.msra.mxu0 0.0
    %651 = vmatprep.subr.mxu0 0.0
    %652 = vmatpush2.msra.mxu0 0.0
    %653 = vmatprep.subr.mxu0 0.0
    %654 = vmatpush2.msra.mxu0 0.0
    %655 = vmatprep.subr.mxu0 0.0
    %656 = vmatpush2.msra.mxu0 0.0
    %657 = vmatprep.subr.mxu0 0.0
    %658 = vmatpush2.msra.mxu0 0.0
    %659 = vmatprep.subr.mxu0 0.0
    %660 = vmatpush2.msra.mxu0 0.0
    %661 = vmatprep.subr.mxu0 0.0
    %662 = vmatpush2.msra.mxu0 0.0
    %663 = vmatprep.subr.mxu0 0.0
    %664 = vmatpush2.msra.mxu0 0.0
    %665 = vmatprep.subr.mxu0 0.0
    %666 = vmatpush2.msra.mxu0 0.0
    %667 = vmatprep.subr.mxu0 0.0
    %668 = vmatpush2.msra.mxu0 0.0
    %669 = vmatprep.subr.mxu0 0.0
    %670 = vmatpush2.msra.mxu0 0.0
    %671 = vmatprep.subr.mxu0 0.0
    %672 = vmatpush2.msra.mxu0 0.0
    %673 = vmatprep.subr.mxu0 0.0
    %674 = vmatpush2.msra.mxu0 0.0
    %675 = vmatprep.subr.mxu0 0.0
    %676 = vmatpush2.msra.mxu0 0.0
    %677 = vmatprep.subr.mxu0 0.0
    %678 = vmatpush2.msra.mxu0 0.0
    %679 = vmatprep.mubr.f32.mxu0 0.0
    %680 = vmatmul.mubr.f32.gmra.mxu0 %v613
    %v681 = vpop.f32.mrf.mxu0
    %v682 = vadd.f32 0.0, %v681
    %v683 = vpop.f32.mrf.mxu0
    %684 = vdwg.mxu0
    %v686 = vrot.slane %v682, 3
    %v688 = vadd.f32 %v48, %v686
    %v689 = vxor.u32 %v688, 2147483648
    %v690 = vmul.f32 %v689, 1.442695
    %v691 = vpow.pop %v690
    %v692 = vadd.f32 %v691, 1.0
    %v693 = vrcp.pop %v692
    %v694 = vmul.f32 1.0, %v693
    %v695 = vmul.f32 %v694, 2.0
    %v696 = vsub.f32 %v695, 1.0
    %v698 = vrot.slane %v602, 7
    %v700 = vmul.f32 %v694, %v698
    %702 = vrot.lane.b32.xlu0 %v696, 92
    %v703 = vpop.permute.xlu0 %702
    %v705 = vmul.f32 %v694, %v703
    %707 = vrot.lane.b32.xlu0 %v705, 18
    %v708 = vpop.permute.xlu0 %707
    %v710 = vadd.f32 %v700, %v708
    %v711 = vtanh.pop %v710
    %713 = vrot.lane.b32.xlu0 %v711, 36
    %v714 = vpop.permute.xlu0 %713
    %v716 = vmul.f32 %v694, %v714
    %v718 = vrot.slane %v716, 5
    %719 = vrot.lane.b32.xlu0 %v718, 74
    %v720 = vpop.permute.xlu0 %719
    %v721 = vsel %vm51, %v720, 0
    %723 = vmatprep.subr.mxu0 0.0
    %724 = vmatpush1.msra.mxu0 0.0
    %725 = vmatprep.subr.mxu0 0.0
    %726 = vmatpush1.msra.mxu0 0.0
    %727 = vmatprep.subr.mxu0 0.0
    %728 = vmatpush1.msra.mxu0 0.0
    %729 = vmatprep.subr.mxu0 0.0
    %730 = vmatpush1.msra.mxu0 0.0
    %731 = vmatprep.subr.mxu0 0.0
    %732 = vmatpush1.msra.mxu0 0.0
    %733 = vmatprep.subr.mxu0 0.0
    %734 = vmatpush1.msra.mxu0 0.0
    %735 = vmatprep.subr.mxu0 0.0
    %736 = vmatpush1.msra.mxu0 0.0
    %737 = vmatprep.subr.mxu0 0.0
    %738 = vmatpush1.msra.mxu0 0.0
    %739 = vmatprep.subr.mxu0 0.0
    %740 = vmatpush1.msra.mxu0 0.0
    %741 = vmatprep.subr.mxu0 0.0
    %742 = vmatpush1.msra.mxu0 0.0
    %743 = vmatprep.subr.mxu0 0.0
    %744 = vmatpush1.msra.mxu0 0.0
    %745 = vmatprep.subr.mxu0 0.0
    %746 = vmatpush1.msra.mxu0 0.0
    %747 = vmatprep.subr.mxu0 0.0
    %748 = vmatpush1.msra.mxu0 0.0
    %749 = vmatprep.subr.mxu0 0.0
    %750 = vmatpush1.msra.mxu0 %v57
    %751 = vmatprep.subr.mxu0 0.0
    %752 = vmatpush1.msra.mxu0 %v27
    %753 = vmatprep.subr.mxu0 0.0
    %754 = vmatpush1.msra.mxu0 %v26
    %755 = vmatprep.subr.mxu0 0.0
    %756 = vmatpush2.msra.mxu0 0.0
    %757 = vmatprep.subr.mxu0 0.0
    %758 = vmatpush2.msra.mxu0 0.0
    %759 = vmatprep.subr.mxu0 0.0
    %760 = vmatpush2.msra.mxu0 0.0
    %761 = vmatprep.subr.mxu0 0.0
    %762 = vmatpush2.msra.mxu0 0.0
    %763 = vmatprep.subr.mxu0 0.0
    %764 = vmatpush2.msra.mxu0 0.0
    %765 = vmatprep.subr.mxu0 0.0
    %766 = vmatpush2.msra.mxu0 0.0
    %767 = vmatprep.subr.mxu0 0.0
    %768 = vmatpush2.msra.mxu0 0.0
    %769 = vmatprep.subr.mxu0 0.0
    %770 = vmatpush2.msra.mxu0 0.0
    %771 = vmatprep.subr.mxu0 0.0
    %772 = vmatpush2.msra.mxu0 0.0
    %773 = vmatprep.subr.mxu0 0.0
    %774 = vmatpush2.msra.mxu0 0.0
    %775 = vmatprep.subr.mxu0 0.0
    %776 = vmatpush2.msra.mxu0 0.0
    %777 = vmatprep.subr.mxu0 0.0
    %778 = vmatpush2.msra.mxu0 0.0
    %779 = vmatprep.subr.mxu0 0.0
    %780 = vmatpush2.msra.mxu0 0.0
    %781 = vmatprep.subr.mxu0 0.0
    %782 = vmatpush2.msra.mxu0 0.0
    %783 = vmatprep.subr.mxu0 0.0
    %784 = vmatpush2.msra.mxu0 0.0
    %785 = vmatprep.subr.mxu0 0.0
    %786 = vmatpush2.msra.mxu0 0.0
    %787 = vmatprep.mubr.f32.mxu0 0.0
    %788 = vmatmul.mubr.f32.gmra.mxu0 %v721
    %v789 = vpop.f32.mrf.mxu0
    %v790 = vadd.f32 0.0, %v789
    %v791 = vpop.f32.mrf.mxu0
    %792 = vdwg.mxu0
    %v794 = vrot.slane %v790, 2
    %v796 = vadd.f32 %v48, %v794
    %v797 = vxor.u32 %v796, 2147483648
    %v798 = vmul.f32 %v797, 1.442695
    %v799 = vpow.pop %v798
    %v800 = vadd.f32 %v799, 1.0
    %v801 = vrcp.pop %v800
    %v802 = vmul.f32 1.0, %v801
    %v803 = vmul.f32 %v802, 2.0
    %v804 = vsub.f32 %v803, 1.0
    %v806 = vrot.slane %v710, 7
    %v808 = vmul.f32 %v802, %v806
    %810 = vrot.lane.b32.xlu0 %v804, 92
    %v811 = vpop.permute.xlu0 %810
    %v813 = vmul.f32 %v802, %v811
    %815 = vrot.lane.b32.xlu0 %v813, 18
    %v816 = vpop.permute.xlu0 %815
    %v818 = vadd.f32 %v808, %v816
    %v819 = vtanh.pop %v818
    %821 = vrot.lane.b32.xlu0 %v819, 36
    %v822 = vpop.permute.xlu0 %821
    %v824 = vmul.f32 %v802, %v822
    %v826 = vrot.slane %v824, 6
    %827 = vrot.lane.b32.xlu0 %v826, 74
    %v828 = vpop.permute.xlu0 %827
    %v829 = vsel %vm51, %v828, 0
    %831 = vmatprep.subr.mxu0 0.0
    %832 = vmatpush1.msra.mxu0 0.0
    %833 = vmatprep.subr.mxu0 0.0
    %834 = vmatpush1.msra.mxu0 0.0
    %835 = vmatprep.subr.mxu0 0.0
    %836 = vmatpush1.msra.mxu0 0.0
    %837 = vmatprep.subr.mxu0 0.0
    %838 = vmatpush1.msra.mxu0 0.0
    %839 = vmatprep.subr.mxu0 0.0
    %840 = vmatpush1.msra.mxu0 0.0
    %841 = vmatprep.subr.mxu0 0.0
    %842 = vmatpush1.msra.mxu0 0.0
    %843 = vmatprep.subr.mxu0 0.0
    %844 = vmatpush1.msra.mxu0 0.0
    %845 = vmatprep.subr.mxu0 0.0
    %846 = vmatpush1.msra.mxu0 0.0
    %847 = vmatprep.subr.mxu0 0.0
    %848 = vmatpush1.msra.mxu0 0.0
    %849 = vmatprep.subr.mxu0 0.0
    %850 = vmatpush1.msra.mxu0 0.0
    %851 = vmatprep.subr.mxu0 0.0
    %852 = vmatpush1.msra.mxu0 0.0
    %853 = vmatprep.subr.mxu0 0.0
    %854 = vmatpush1.msra.mxu0 0.0
    %855 = vmatprep.subr.mxu0 0.0
    %856 = vmatpush1.msra.mxu0 0.0
    %857 = vmatprep.subr.mxu0 0.0
    %858 = vmatpush1.msra.mxu0 %v57
    %859 = vmatprep.subr.mxu0 0.0
    %860 = vmatpush1.msra.mxu0 %v27
    %861 = vmatprep.subr.mxu0 0.0
    %862 = vmatpush1.msra.mxu0 %v26
    %863 = vmatprep.subr.mxu0 0.0
    %864 = vmatpush2.msra.mxu0 0.0
    %865 = vmatprep.subr.mxu0 0.0
    %866 = vmatpush2.msra.mxu0 0.0
    %867 = vmatprep.subr.mxu0 0.0
    %868 = vmatpush2.msra.mxu0 0.0
    %869 = vmatprep.subr.mxu0 0.0
    %870 = vmatpush2.msra.mxu0 0.0
    %871 = vmatprep.subr.mxu0 0.0
    %872 = vmatpush2.msra.mxu0 0.0
    %873 = vmatprep.subr.mxu0 0.0
    %874 = vmatpush2.msra.mxu0 0.0
    %875 = vmatprep.subr.mxu0 0.0
    %876 = vmatpush2.msra.mxu0 0.0
    %877 = vmatprep.subr.mxu0 0.0
    %878 = vmatpush2.msra.mxu0 0.0
    %879 = vmatprep.subr.mxu0 0.0
    %880 = vmatpush2.msra.mxu0 0.0
    %881 = vmatprep.subr.mxu0 0.0
    %882 = vmatpush2.msra.mxu0 0.0
    %883 = vmatprep.subr.mxu0 0.0
    %884 = vmatpush2.msra.mxu0 0.0
    %885 = vmatprep.subr.mxu0 0.0
    %886 = vmatpush2.msra.mxu0 0.0
    %887 = vmatprep.subr.mxu0 0.0
    %888 = vmatpush2.msra.mxu0 0.0
    %889 = vmatprep.subr.mxu0 0.0
    %890 = vmatpush2.msra.mxu0 0.0
    %891 = vmatprep.subr.mxu0 0.0
    %892 = vmatpush2.msra.mxu0 0.0
    %893 = vmatprep.subr.mxu0 0.0
    %894 = vmatpush2.msra.mxu0 0.0
    %895 = vmatprep.mubr.f32.mxu0 0.0
    %896 = vmatmul.mubr.f32.gmra.mxu0 %v829
    %v897 = vpop.f32.mrf.mxu0
    %v898 = vadd.f32 0.0, %v897
    %v899 = vpop.f32.mrf.mxu0
    %900 = vdwg.mxu0
    %v902 = vrot.slane %v898, 1
    %v904 = vadd.f32 %v48, %v902
    %v905 = vxor.u32 %v904, 2147483648
    %v906 = vmul.f32 %v905, 1.442695
    %v907 = vpow.pop %v906
    %v908 = vadd.f32 %v907, 1.0
    %v909 = vrcp.pop %v908
    %v910 = vmul.f32 1.0, %v909
    %v911 = vmul.f32 %v910, 2.0
    %v912 = vsub.f32 %v911, 1.0
    %v914 = vrot.slane %v818, 7
    %v916 = vmul.f32 %v910, %v914
    %918 = vrot.lane.b32.xlu0 %v912, 92
    %v919 = vpop.permute.xlu0 %918
    %v921 = vmul.f32 %v910, %v919
    %923 = vrot.lane.b32.xlu0 %v921, 18
    %v924 = vpop.permute.xlu0 %923
    %v926 = vadd.f32 %v916, %v924
    %v927 = vtanh.pop %v926
    %929 = vrot.lane.b32.xlu0 %v927, 36
    %v930 = vpop.permute.xlu0 %929
    %v932 = vmul.f32 %v910, %v930
    %v934 = vrot.slane %v932, 7
    %935 = vrot.lane.b32.xlu0 %v934, 74
    %v936 = vpop.permute.xlu0 %935
    %v937 = vsel %vm51, %v936, 0
    %939 = vmatprep.subr.mxu0 0.0
    %940 = vmatpush1.msra.mxu0 0.0
    %941 = vmatprep.subr.mxu0 0.0
    %942 = vmatpush1.msra.mxu0 0.0
    %943 = vmatprep.subr.mxu0 0.0
    %944 = vmatpush1.msra.mxu0 0.0
    %945 = vmatprep.subr.mxu0 0.0
    %946 = vmatpush1.msra.mxu0 0.0
    %947 = vmatprep.subr.mxu0 0.0
    %948 = vmatpush1.msra.mxu0 0.0
    %949 = vmatprep.subr.mxu0 0.0
    %950 = vmatpush1.msra.mxu0 0.0
    %951 = vmatprep.subr.mxu0 0.0
    %952 = vmatpush1.msra.mxu0 0.0
    %953 = vmatprep.subr.mxu0 0.0
    %954 = vmatpush1.msra.mxu0 0.0
    %955 = vmatprep.subr.mxu0 0.0
    %956 = vmatpush1.msra.mxu0 0.0
    %957 = vmatprep.subr.mxu0 0.0
    %958 = vmatpush1.msra.mxu0 0.0
    %959 = vmatprep.subr.mxu0 0.0
    %960 = vmatpush1.msra.mxu0 0.0
    %961 = vmatprep.subr.mxu0 0.0
    %962 = vmatpush1.msra.mxu0 0.0
    %963 = vmatprep.subr.mxu0 0.0
    %964 = vmatpush1.msra.mxu0 0.0
    %965 = vmatprep.subr.mxu0 0.0
    %966 = vmatpush1.msra.mxu0 %v57
    %967 = vmatprep.subr.mxu0 0.0
    %968 = vmatpush1.msra.mxu0 %v27
    %969 = vmatprep.subr.mxu0 0.0
    %970 = vmatpush1.msra.mxu0 %v26
    %971 = vmatprep.subr.mxu0 0.0
    %972 = vmatpush2.msra.mxu0 0.0
    %973 = vmatprep.subr.mxu0 0.0
    %974 = vmatpush2.msra.mxu0 0.0
    %975 = vmatprep.subr.mxu0 0.0
    %976 = vmatpush2.msra.mxu0 0.0
    %977 = vmatprep.subr.mxu0 0.0
    %978 = vmatpush2.msra.mxu0 0.0
    %979 = vmatprep.subr.mxu0 0.0
    %980 = vmatpush2.msra.mxu0 0.0
    %981 = vmatprep.subr.mxu0 0.0
    %982 = vmatpush2.msra.mxu0 0.0
    %983 = vmatprep.subr.mxu0 0.0
    %984 = vmatpush2.msra.mxu0 0.0
    %985 = vmatprep.subr.mxu0 0.0
    %986 = vmatpush2.msra.mxu0 0.0
    %987 = vmatprep.subr.mxu0 0.0
    %988 = vmatpush2.msra.mxu0 0.0
    %989 = vmatprep.subr.mxu0 0.0
    %990 = vmatpush2.msra.mxu0 0.0
    %991 = vmatprep.subr.mxu0 0.0
    %992 = vmatpush2.msra.mxu0 0.0
    %993 = vmatprep.subr.mxu0 0.0
    %994 = vmatpush2.msra.mxu0 0.0
    %995 = vmatprep.subr.mxu0 0.0
    %996 = vmatpush2.msra.mxu0 0.0
    %997 = vmatprep.subr.mxu0 0.0
    %998 = vmatpush2.msra.mxu0 0.0
    %999 = vmatprep.subr.mxu0 0.0
    %1000 = vmatpush2.msra.mxu0 0.0
    %1001 = vmatprep.subr.mxu0 0.0
    %1002 = vmatpush2.msra.mxu0 0.0
    %1003 = vmatprep.mubr.f32.mxu0 0.0
    %1004 = vmatmul.mubr.f32.gmra.mxu0 %v937
    %v1005 = vpop.f32.mrf.mxu0
    %v1006 = vadd.f32 0.0, %v1005
    %v1007 = vpop.f32.mrf.mxu0
    %1008 = vdwg.mxu0
    %v1009 = vadd.f32 %v29, %v1006
    %v1010 = vxor.u32 %v1009, 2147483648
    %v1011 = vmul.f32 %v1010, 1.442695
    %v1012 = vpow.pop %v1011
    %v1013 = vadd.f32 %v1012, 1.0
    %v1014 = vrcp.pop %v1013
    %v1015 = vmul.f32 1.0, %v1014
    %v1016 = vmul.f32 %v1015, 2.0
    %v1017 = vsub.f32 %v1016, 1.0
    %v1019 = vrot.slane %v926, 7
    %v1021 = vmul.f32 %v1015, %v1019
    %1023 = vrot.lane.b32.xlu0 %v1017, 92
    %v1024 = vpop.permute.xlu0 %1023
    %v1026 = vmul.f32 %v1015, %v1024
    %1028 = vrot.lane.b32.xlu0 %v1026, 18
    %v1029 = vpop.permute.xlu0 %1028
    %v1031 = vadd.f32 %v1021, %v1029
    %v1032 = vtanh.pop %v1031
    %1034 = vrot.lane.b32.xlu0 %v1032, 36
    %v1035 = vpop.permute.xlu0 %1034
    %v1037 = vmul.f32 %v1015, %v1035
    %1039 = vrot.lane.b32.xlu0 %v1037, 74
    %v1040 = vpop.permute.xlu0 %1039
    %v1041 = vsel %vm51, %v1040, 0
    %1043 = vmatprep.subr.mxu0 0.0
    %1044 = vmatpush1.msra.mxu0 0.0
    %1045 = vmatprep.subr.mxu0 0.0
    %1046 = vmatpush1.msra.mxu0 0.0
    %1047 = vmatprep.subr.mxu0 0.0
    %1048 = vmatpush1.msra.mxu0 0.0
    %1049 = vmatprep.subr.mxu0 0.0
    %1050 = vmatpush1.msra.mxu0 0.0
    %1051 = vmatprep.subr.mxu0 0.0
    %1052 = vmatpush1.msra.mxu0 0.0
    %1053 = vmatprep.subr.mxu0 0.0
    %1054 = vmatpush1.msra.mxu0 0.0
    %1055 = vmatprep.subr.mxu0 0.0
    %1056 = vmatpush1.msra.mxu0 0.0
    %1057 = vmatprep.subr.mxu0 0.0
    %1058 = vmatpush1.msra.mxu0 0.0
    %1059 = vmatprep.subr.mxu0 0.0
    %1060 = vmatpush1.msra.mxu0 0.0
    %1061 = vmatprep.subr.mxu0 0.0
    %1062 = vmatpush1.msra.mxu0 0.0
    %1063 = vmatprep.subr.mxu0 0.0
    %1064 = vmatpush1.msra.mxu0 0.0
    %1065 = vmatprep.subr.mxu0 0.0
    %1066 = vmatpush1.msra.mxu0 0.0
    %1067 = vmatprep.subr.mxu0 0.0
    %1068 = vmatpush1.msra.mxu0 0.0
    %1069 = vmatprep.subr.mxu0 0.0
    %1070 = vmatpush1.msra.mxu0 %v57
    %1071 = vmatprep.subr.mxu0 0.0
    %1072 = vmatpush1.msra.mxu0 %v27
    %1073 = vmatprep.subr.mxu0 0.0
    %1074 = vmatpush1.msra.mxu0 %v26
    %1075 = vmatprep.subr.mxu0 0.0
    %1076 = vmatpush2.msra.mxu0 0.0
    %1077 = vmatprep.subr.mxu0 0.0
    %1078 = vmatpush2.msra.mxu0 0.0
    %1079 = vmatprep.subr.mxu0 0.0
    %1080 = vmatpush2.msra.mxu0 0.0
    %1081 = vmatprep.subr.mxu0 0.0
    %1082 = vmatpush2.msra.mxu0 0.0
    %1083 = vmatprep.subr.mxu0 0.0
    %1084 = vmatpush2.msra.mxu0 0.0
    %1085 = vmatprep.subr.mxu0 0.0
    %1086 = vmatpush2.msra.mxu0 0.0
    %1087 = vmatprep.subr.mxu0 0.0
    %1088 = vmatpush2.msra.mxu0 0.0
    %1089 = vmatprep.subr.mxu0 0.0
    %1090 = vmatpush2.msra.mxu0 0.0
    %1091 = vmatprep.subr.mxu0 0.0
    %1092 = vmatpush2.msra.mxu0 0.0
    %1093 = vmatprep.subr.mxu0 0.0
    %1094 = vmatpush2.msra.mxu0 0.0
    %1095 = vmatprep.subr.mxu0 0.0
    %1096 = vmatpush2.msra.mxu0 0.0
    %1097 = vmatprep.subr.mxu0 0.0
    %1098 = vmatpush2.msra.mxu0 0.0
    %1099 = vmatprep.subr.mxu0 0.0
    %1100 = vmatpush2.msra.mxu0 0.0
    %1101 = vmatprep.subr.mxu0 0.0
    %1102 = vmatpush2.msra.mxu0 0.0
    %1103 = vmatprep.subr.mxu0 0.0
    %1104 = vmatpush2.msra.mxu0 0.0
    %1105 = vmatprep.subr.mxu0 0.0
    %1106 = vmatpush2.msra.mxu0 0.0
    %1107 = vmatprep.mubr.f32.mxu0 0.0
    %1108 = vmatmul.mubr.f32.gmra.mxu0 %v1041
    %v1109 = vpop.f32.mrf.mxu0
    %v1110 = vadd.f32 0.0, %v1109
    %v1111 = vpop.f32.mrf.mxu0
    %1112 = vdwg.mxu0
    %v1113 = vadd.f32 %v29, %v1110
    %v1114 = vxor.u32 %v1113, 2147483648
    %v1115 = vmul.f32 %v1114, 1.442695
    %v1116 = vpow.pop %v1115
    %v1117 = vadd.f32 %v1116, 1.0
    %v1118 = vrcp.pop %v1117
    %v1119 = vmul.f32 1.0, %v1118
    %v1120 = vmul.f32 %v1119, 2.0
    %v1121 = vsub.f32 %v1120, 1.0
    %v1122 = vmul.f32 %v1119, %v1031
    %1124 = vrot.lane.b32.xlu0 %v1121, 92
    %v1125 = vpop.permute.xlu0 %1124
    %v1127 = vmul.f32 %v1119, %v1125
    %1129 = vrot.lane.b32.xlu0 %v1127, 18
    %v1130 = vpop.permute.xlu0 %1129
    %v1132 = vadd.f32 %v1122, %v1130
    %v1133 = vtanh.pop %v1132
    %1135 = vrot.lane.b32.xlu0 %v1133, 36
    %v1136 = vpop.permute.xlu0 %1135
    %v1138 = vmul.f32 %v1119, %v1136
    %1140 = vrot.lane.b32.xlu0 %v31, 54
    %v1141 = vpop.permute.xlu0 %1140
    %v1143 = vmul.f32 %v1138, %v1141
    %1145 = vrot.lane.b32.xlu0 %v1143, 74
    %v1146 = vpop.permute.xlu0 %1145
    %vm1148 = vcmask 139264
    %v1149 = vsel %vm1148, %v1146, 0.0
    %1150 = vadd.xlane.f32.xlu0 %v1149
    %v1151 = vpop.xlane.xlu0 %1150
    %v1152 = vadd.f32 %v1151, %v32
    %vm1153 = vcmask 0
    %1154 = vst.msk [vmem:[#allocation5] sm:$0x1] %vm1153, %v1152
    // Predicated region
    $region14: #{forward.1} parent=1 // pred_check
      _
    $region15: #{forward.1} parent=1 // pred_check_branch
      %1156 = sbr.rel (0) target = $region17
    $region16: #{forward.1} parent=1 // pred_region
      %s1158 = ssub.s32 16, 16
      %1159 = vsyncadd [#allocation4], %s1158
      %s1161 = sshll.u32 [#allocation5], 4
      %s1162 = int_to_ptr.vmem [resolvable:$true] %s1161
      %1164 = dma.vmem_to_hbm [thread:$0]  %s1162, 16, %s2, [#allocation4]
    $region17: #{forward.1} parent=1 // pred_fallthru
      _
    // Predicated region
    $region18: #{forward.1} parent=1 // pred_check
      _
    $region19: #{forward.1} parent=1 // pred_check_branch
      %1166 = sbr.rel (0) target = $region21
    $region20: #{forward.1} parent=1 // pred_region
      %1167 = dma.done [#allocation4], 16
    $region21: #{forward.1} parent=1 // pred_fallthru
      _
    %1168 = vsyncpa [#allocation3], 1
    %1169 = vsyncpa [#allocation4], 1

</llo_original>
